<compile_context>
chip_gen: v7x
topology: tpu7x:2x2x1
jax: 0.10.0
libtpu: 0.0.40
codegen_flags: <defaults>
</compile_context>

<pallas_src>
import functools

import jax
import jax.numpy as jnp
from jax.experimental import pallas as pl
from jax.experimental.pallas import tpu as pltpu


def _classifier_kernel(x_ref, w_ref, b_ref, o_ref, acc_ref, *,
                       apply_sigmoid: bool, num_features: int, tk: int):
    """One (batch-tile, feature-tile) grid step.

    x_ref:   (TB, TK) VMEM input tile
    w_ref:   (1, TK)  VMEM lane-dense weight tile
    b_ref:   (1,)     SMEM bias (scalar read)
    o_ref:   (TB, 1)  VMEM output tile (resident across the K axis)
    acc_ref: (TB, 1)  f32 VMEM accumulator scratch
    """
    k = pl.program_id(1)

    @pl.when(k == 0)
    def _init():
        acc_ref[...] = jnp.zeros_like(acc_ref)

    x = x_ref[...].astype(jnp.float32)          # (TB, TK)
    w = w_ref[...].astype(jnp.float32)          # (1, TK), broadcasts over rows
    prod = x * w                                # VPU

    # Mask the ragged tail of the feature axis. Static check: only emitted
    # when the feature tile does not evenly divide num_features.
    if num_features % tk != 0:
        col = jax.lax.broadcasted_iota(jnp.int32, prod.shape, 1) + k * tk
        prod = jnp.where(col < num_features, prod, 0.0)

    acc_ref[...] += jnp.sum(prod, axis=-1, keepdims=True)   # XLU lane reduce

    @pl.when(k == pl.num_programs(1) - 1)
    def _finalize():
        y = acc_ref[...] + b_ref[0]
        if apply_sigmoid:
            y = jax.nn.sigmoid(y)               # EUP
        o_ref[...] = y.astype(o_ref.dtype)


def review_classifier_forward(x, weight, bias, apply_sigmoid=False,
                              block_batch=512, block_features=2048):
    """Pallas equivalent of ReviewClassifier.forward.

    Args:
      x:      (batch, num_features) float array
      weight: (1, num_features)  -- same layout as nn.Linear.weight
      bias:   (1,)               -- same layout as nn.Linear.bias
      apply_sigmoid: static Python bool
    Returns:
      (batch,) float32 (scalar if batch == 1, matching torch .squeeze()).
    """
    batch, num_features = x.shape

    # Batch tile: multiple of 8 sublanes (or the full batch if it is small).
    if batch <= block_batch:
        tb = batch
    else:
        tb = max(8, (block_batch // 8) * 8)
    # Feature tile: multiple of 128 lanes (or the full feature dim if small).
    if num_features <= block_features:
        tk = num_features
    else:
        tk = max(128, (block_features // 128) * 128)

    grid = (pl.cdiv(batch, tb), pl.cdiv(num_features, tk))

    kernel = functools.partial(
        _classifier_kernel,
        apply_sigmoid=apply_sigmoid,
        num_features=num_features,
        tk=tk,
    )

    # Double-buffered x tiles dominate VMEM; size the scoped limit with
    # headroom (default tiles: 2 * 512 * 2048 * 4B = 8 MiB, well under the
    # v7x 64 MiB physical / 32 MiB scoped budget).
    bpe = int(jnp.dtype(x.dtype).itemsize)
    vmem_need = 2 * tb * tk * bpe + 2 * tk * bpe + 3 * tb * 4 + (1 << 20)
    vmem_limit = int(max(vmem_need, 16 << 20))

    cost = pl.CostEstimate(
        flops=2 * batch * num_features,
        transcendentals=batch if apply_sigmoid else 0,
        bytes_accessed=bpe * (batch * num_features + num_features)
                       + 4 * (batch + 1),
    )

    y = pl.pallas_call(
        kernel,
        out_shape=jax.ShapeDtypeStruct((batch, 1), jnp.float32),
        grid_spec=pltpu.PrefetchScalarGridSpec(
            num_scalar_prefetch=0,
            grid=grid,
            in_specs=[
                pl.BlockSpec((tb, tk), lambda i, k: (i, k)),          # x
                pl.BlockSpec((1, tk), lambda i, k: (0, k)),           # weight
                pl.BlockSpec(memory_space=pltpu.MemorySpace.SMEM),    # bias
            ],
            out_specs=pl.BlockSpec((tb, 1), lambda i, k: (i, 0)),
            scratch_shapes=[pltpu.VMEM((tb, 1), jnp.float32)],
        ),
        compiler_params=pltpu.CompilerParams(
            dimension_semantics=("parallel", "arbitrary"),
            vmem_limit_bytes=vmem_limit,
        ),
        cost_estimate=cost,
    )(x, weight, bias)

    return jnp.squeeze(y)   # (batch, 1) -> (batch,), scalar if batch == 1


if __name__ == "__main__":
    key = jax.random.PRNGKey(0)
    kx, kw, kb, kx2 = jax.random.split(key, 4)

    # Small shapes consistent with the module: (batch, num_features).
    batch, num_features = 8, 32
    x = jax.random.normal(kx, (batch, num_features), dtype=jnp.float32)
    bound = 1.0 / (num_features ** 0.5)
    weight = jax.random.uniform(kw, (1, num_features), jnp.float32, -bound, bound)
    bias = jax.random.uniform(kb, (1,), jnp.float32, -bound, bound)

    y_logits = jax.block_until_ready(
        review_classifier_forward(x, weight, bias, apply_sigmoid=False))
    y_probs = jax.block_until_ready(
        review_classifier_forward(x, weight, bias, apply_sigmoid=True))

    ref_logits = jnp.sum(x * weight, axis=-1) + bias[0]
    ref_probs = jax.nn.sigmoid(ref_logits)
    assert y_logits.shape == (batch,)
    assert jnp.allclose(y_logits, ref_logits, atol=1e-5)
    assert jnp.allclose(y_probs, ref_probs, atol=1e-5)

    # Second config exercising batch tiling, the SMEM bias, and the ragged
    # feature-axis masking path (640 % 512 != 0, 2500 % 1024 != 0).
    b2, f2 = 640, 2500
    x2 = jax.random.normal(kx2, (b2, f2), dtype=jnp.float32)
    bound2 = 1.0 / (f2 ** 0.5)
    w2 = jax.random.uniform(kw, (1, f2), jnp.float32, -bound2, bound2)
    bias2 = jax.random.uniform(kb, (1,), jnp.float32, -bound2, bound2)
    y2 = jax.block_until_ready(
        review_classifier_forward(x2, w2, bias2, apply_sigmoid=False,
                                  block_batch=512, block_features=1024))
    ref2 = jnp.sum(x2 * w2, axis=-1) + bias2[0]
    assert y2.shape == (b2,)
    assert jnp.allclose(y2, ref2, atol=1e-4, rtol=1e-4)

    print("KERNEL_OK")
</pallas_src>

<mosaic_0001>
module attributes {stable_mosaic.version = 11 : i64} {
  func.func @_classifier_kernel(%arg0: i32, %arg1: i32, %arg2: memref<8x32xf32, #tpu.memory_space<vmem>>, %arg3: memref<1x32xf32, #tpu.memory_space<vmem>>, %arg4: memref<1xf32, #tpu.memory_space<smem>>, %arg5: memref<8x1xf32, #tpu.memory_space<vmem>>, %arg6: memref<8x1xf32, #tpu.memory_space<vmem>>) attributes {dimension_semantics = [#tpu.dimension_semantics<parallel>, #tpu.dimension_semantics<arbitrary>], iteration_bounds = array<i64: 1, 1>, scalar_prefetch = 0 : i64, scratch_operands = 1 : i64, tpu.core_type = #tpu.core_type<tc>, window_params = [{transform_indices = @transform_0, window_bounds = array<i64: 8, 32>}, {transform_indices = @transform_1, window_bounds = array<i64: 1, 32>}, {transform_indices = @transform_2, window_bounds = array<i64: 1>}, {transform_indices = @transform_3, window_bounds = array<i64: 8, 1>}]} {
    %c0_i32 = arith.constant 0 : i32
    %0 = arith.cmpi eq, %arg1, %c0_i32 : i32
    %1 = arith.extui %0 : i1 to i32
    %c0_i32_0 = arith.constant 0 : i32
    %2 = arith.cmpi ne, %1, %c0_i32_0 : i32
    scf.if %2 {
      %cst_10 = arith.constant 0.000000e+00 : f32
      %15 = vector.broadcast %cst_10 : f32 to vector<8x1xf32>
      %c0_11 = arith.constant 0 : index
      %c0_12 = arith.constant 0 : index
      %16 = vector.load %arg6[%c0_11, %c0_12] : memref<8x1xf32, #tpu.memory_space<vmem>>, vector<8x1xf32>
      tpu.vector_store %arg6[%c0_11, %c0_12], %15 {strides = array<i32>} : memref<8x1xf32, #tpu.memory_space<vmem>>, vector<8x1xf32>,
    } else {
    }
    %c0 = arith.constant 0 : index
    %c0_1 = arith.constant 0 : index
    %3 = vector.load %arg2[%c0, %c0_1] : memref<8x32xf32, #tpu.memory_space<vmem>>, vector<8x32xf32>
    %c0_2 = arith.constant 0 : index
    %c0_3 = arith.constant 0 : index
    %4 = vector.load %arg3[%c0_2, %c0_3] : memref<1x32xf32, #tpu.memory_space<vmem>>, vector<1x32xf32>
    %5 = vector.broadcast %4 : vector<1x32xf32> to vector<8x32xf32>
    %6 = arith.mulf %3, %5 : vector<8x32xf32>
    %c0_4 = arith.constant 0 : index
    %c0_5 = arith.constant 0 : index
    %7 = vector.load %arg6[%c0_4, %c0_5] : memref<8x1xf32, #tpu.memory_space<vmem>>, vector<8x1xf32>
    %cst = arith.constant dense<0.000000e+00> : vector<8xf32>
    %8 = vector.multi_reduction <add>, %6, %cst [1] : vector<8x32xf32> to vector<8xf32>
    %9 = vector.shape_cast %8 : vector<8xf32> to vector<8x1xf32>
    %10 = arith.addf %7, %9 : vector<8x1xf32>
    %c0_6 = arith.constant 0 : index
    %c0_7 = arith.constant 0 : index
    %11 = vector.load %arg6[%c0_6, %c0_7] : memref<8x1xf32, #tpu.memory_space<vmem>>, vector<8x1xf32>
    tpu.vector_store %arg6[%c0_6, %c0_7], %10 {strides = array<i32>} : memref<8x1xf32, #tpu.memory_space<vmem>>, vector<8x1xf32>,
    %c0_i32_8 = arith.constant 0 : i32
    %12 = arith.cmpi eq, %arg1, %c0_i32_8 : i32
    %13 = arith.extui %12 : i1 to i32
    %c0_i32_9 = arith.constant 0 : i32
    %14 = arith.cmpi ne, %13, %c0_i32_9 : i32
    scf.if %14 {
      %c0_10 = arith.constant 0 : index
      %c0_11 = arith.constant 0 : index
      %15 = vector.load %arg6[%c0_10, %c0_11] : memref<8x1xf32, #tpu.memory_space<vmem>>, vector<8x1xf32>
      %c0_12 = arith.constant 0 : index
      %16 = memref.load %arg4[%c0_12] : memref<1xf32, #tpu.memory_space<smem>>
      %17 = vector.broadcast %16 : f32 to vector<8x1xf32>
      %18 = arith.addf %15, %17 : vector<8x1xf32>
      %c0_13 = arith.constant 0 : index
      %c0_14 = arith.constant 0 : index
      %19 = vector.load %arg5[%c0_13, %c0_14] : memref<8x1xf32, #tpu.memory_space<vmem>>, vector<8x1xf32>
      tpu.vector_store %arg5[%c0_13, %c0_14], %18 {strides = array<i32>} : memref<8x1xf32, #tpu.memory_space<vmem>>, vector<8x1xf32>,
    } else {
    }
    return
  }
  func.func @transform_0(%arg0: i32, %arg1: i32) -> (i32, i32) {
    %c0_i32 = arith.constant 0 : i32
    return %arg0, %arg1 : i32, i32
  }
  func.func @transform_1(%arg0: i32, %arg1: i32) -> (i32, i32) {
    %c0_i32 = arith.constant 0 : i32
    %c0_i32_0 = arith.constant 0 : i32
    return %c0_i32, %arg1 : i32, i32
  }
  func.func @transform_2(%arg0: i32, %arg1: i32) -> i32 {
    %c0_i32 = arith.constant 0 : i32
    %c0_i32_0 = arith.constant 0 : i32
    return %c0_i32 : i32
  }
  func.func @transform_3(%arg0: i32, %arg1: i32) -> (i32, i32) {
    %c0_i32 = arith.constant 0 : i32
    %c0_i32_0 = arith.constant 0 : i32
    return %arg0, %c0_i32 : i32, i32
  }
}

</mosaic_0001>

<llo_original>
// kernel: tpu_custom_call.1
$region0: #{tpu_custom_call.1}
  #allocation0 [shape = 'u32[]', space=smem, size = 0x4, offset = 0x4, fixed_abs, tag = 'smem constant byte address 0x4 - core index']
  #allocation1 [shape = 'u32[144,128]{1,0:T(1,128)}', space=vmem, size = 0x12000, scoped, tag = 'internal scratch']
  #allocation2 [shape = 'f32[8,1]{1,0:T(8,128)}', space=vmem, size = 0x1000, scoped, tag = 'scratch operand']
  #allocation3 [shape = 'f32[1]{0:T(128)S(6)}', space=smem, size = 0x200, scoped, tag = 'scoped memory for tpu_custom_call.1']
  %s0 = inlined_call_operand.hbm [shape: f32[8,32], index: 0, kind: input, shape index: {}]
  %s1 = inlined_call_operand.vmem [shape: f32[1,32], index: 1, kind: input, shape index: {}]
  %s2 = inlined_call_operand.<no memory space> [shape: f32[1], index: 2, kind: input, shape index: {}]
  %s3 = inlined_call_operand.vmem [shape: f32[8,1], index: 3, kind: output, shape index: {}]
  %s4 = sld [smem:[#allocation0]]
  $region34: #{tpu_custom_call.1} parent=0
    _
  %s6 = ssub.s32 1, %s4
  %s7 = scalar_select 0, %s6, %s4
  %8 = sst [smem:[#allocation3]] %s2
  $region1: #{tpu_custom_call.1} parent=0
    #allocation4 [shape = 'u8[4096]{0}', space=vmem, size = 0x1000, scoped, tag = 'input window, operand 0, single buffered']
    #allocation5 [shape = 's32[1]{0}', space=sflag, size = 0x4, scoped, tag = 'scoped memory for tpu_custom_call.1']
    %9 = vsyncpa [#allocation5], 0
    // Predicated region
    $region2: #{tpu_custom_call.1} parent=1 // pred_check
      _
    $region3: #{tpu_custom_call.1} parent=1 // pred_check_branch
      %11 = sbr.rel (0) target = $region5
    $region4: #{tpu_custom_call.1} parent=1 // pred_region
      %s13 = ssub.s32 128, 128
      %14 = vsyncadd [#allocation5], %s13
      %s16 = sshll.u32 [#allocation4], 4
      %s17 = int_to_ptr.vmem [resolvable:$true] %s16
      %19 = dma.hbm_to_vmem [thread:$0]  %s0, 128, %s17, [#allocation5]
    $region5: #{tpu_custom_call.1} parent=1 // pred_fallthru
      _
    // Predicated region
    $region6: #{tpu_custom_call.1} parent=1 // pred_check
      _
    $region7: #{tpu_custom_call.1} parent=1 // pred_check_branch
      %21 = sbr.rel (0) target = $region9
    $region8: #{tpu_custom_call.1} parent=1 // pred_region
      _
    $region9: #{tpu_custom_call.1} parent=1 // pred_fallthru
      _
    // Predicated region
    $region10: #{tpu_custom_call.1} parent=1 // pred_check
      _
    $region11: #{tpu_custom_call.1} parent=1 // pred_check_branch
      %23 = sbr.rel (0) target = $region13
    $region12: #{tpu_custom_call.1} parent=1 // pred_region
      _
    $region13: #{tpu_custom_call.1} parent=1 // pred_fallthru
      _
    // Predicated region
    $region14: #{tpu_custom_call.1} parent=1 // pred_check
      _
    $region15: #{tpu_custom_call.1} parent=1 // pred_check_branch
      %25 = sbr.rel (0) target = $region17
    $region16: #{tpu_custom_call.1} parent=1 // pred_region
      %26 = dma.done [#allocation5], 128
    $region17: #{tpu_custom_call.1} parent=1 // pred_fallthru
      _
    %p27 = scmp.eq.s32.totalorder 0, 0
    // Predicated region
    $region18: #{tpu_custom_call.1} parent=1 // pred_check
      %p28 = pneg %p27
    $region19: #{tpu_custom_call.1} parent=1 // pred_check_branch
      %30 = sbr.rel (%p28) target = $region21
    $region20: #{tpu_custom_call.1} parent=1 // pred_region
      %vm31 = vcmask 7168
      %32 = vst.msk [vmem:[#allocation2] sm:$0xff] %vm31, 0.0
    $region21: #{tpu_custom_call.1} parent=1 // pred_fallthru
      _
    %v33 = vld [vmem:[#allocation4] sm:$0xff]
    %v34 = vld [vmem:[%s1] sm:$0x1]
    %v36 = vlaneseq
    %v37 = vshrl.u32 %v36, 7
    %v38 = vsub.s32 0, %v37
    %v39 = vrot.slane %v34, %v38
    %v41 = vmul.f32 %v33, %v39
    %v42 = vld [vmem:[#allocation2] sm:$0xff]
    %vm43 = vcmask 261120
    %v44 = vsel %vm43, %v41, 0.0
    %45 = vadd.xlane.f32.xlu0 %v44
    %v46 = vpop.xlane.xlu0 %45
    %v47 = vadd.f32 %v42, %v46
    %vm48 = vcmask 7168
    %49 = vst.msk [vmem:[#allocation2] sm:$0xff] %vm48, %v47
    // Predicated region
    $region22: #{tpu_custom_call.1} parent=1 // pred_check
      %p50 = pneg %p27
    $region23: #{tpu_custom_call.1} parent=1 // pred_check_branch
      %52 = sbr.rel (%p50) target = $region25
    $region24: #{tpu_custom_call.1} parent=1 // pred_region
      %v53 = vld [vmem:[#allocation2] sm:$0xff]
      %s54 = sld [smem:[#allocation3]]
      %v55 = vstv %s54
      %v56 = vadd.f32 %v53, %v55
      %57 = vst.msk [vmem:[%s3] sm:$0xff] %vm48, %v56
    $region25: #{tpu_custom_call.1} parent=1 // pred_fallthru
      _
    // Predicated region
    $region26: #{tpu_custom_call.1} parent=1 // pred_check
      _
    $region27: #{tpu_custom_call.1} parent=1 // pred_check_branch
      %59 = sbr.rel (0) target = $region29
    $region28: #{tpu_custom_call.1} parent=1 // pred_region
      _
    $region29: #{tpu_custom_call.1} parent=1 // pred_fallthru
      _
    // Predicated region
    $region30: #{tpu_custom_call.1} parent=1 // pred_check
      _
    $region31: #{tpu_custom_call.1} parent=1 // pred_check_branch
      %61 = sbr.rel (0) target = $region33
    $region32: #{tpu_custom_call.1} parent=1 // pred_region
      _
    $region33: #{tpu_custom_call.1} parent=1 // pred_fallthru
      _
    %62 = vsyncpa [#allocation5], 1

</llo_original>
